<compile_context>
chip_gen: v7x
topology: tpu7x:2x2x1
jax: 0.10.0
libtpu: 0.0.40
codegen_flags: <defaults>
</compile_context>

<pallas_src>
import jax
import jax.numpy as jnp
from jax.experimental import pallas as pl
from jax.experimental.pallas import tpu as pltpu

IN_FEATURES = 28 * 28   # 784
H1 = 128
H2 = 64
OUT_FEATURES = 10
OUT_PAD = 128           # lane-dense padded logits width used only in-register
TILE_B_MAX = 1024       # cap: f32 x tile (3.1 MiB) double-buffered + weights
MIN_TILE_B = 512        # keep tiles large enough to amortize per-step overhead
NEG_BIG = -1.0e30       # bias for padded logit columns -> exp underflows to 0
VMEM_LIMIT_BYTES = 32 * 1024 * 1024  # explicit budget; ~10 MiB actually used


def mlp_logsoftmax_kernel(x_ref, w1_ref, b1_ref, w2_ref, b2_ref,
                          w3_ref, b3_ref, o_ref):
    """One batch tile of the fused forward pass.

    x arrives as float32 (single HBM pass) and is cast to bf16 on the VPU
    right before the first MXU pass; weights are bf16; accumulation,
    bias-add, ReLU and the log-softmax are float32.
    """
    x = x_ref[...].astype(jnp.bfloat16)                          # (TB, 784) bf16

    # Linear(784, 128) + ReLU
    h1 = jnp.dot(x, w1_ref[...], preferred_element_type=jnp.float32)
    h1 = jnp.maximum(h1 + b1_ref[...], 0.0)                      # (TB, 128) f32

    # Linear(128, 64) + ReLU
    h2 = jnp.dot(h1.astype(jnp.bfloat16), w2_ref[...],
                 preferred_element_type=jnp.float32)
    h2 = jnp.maximum(h2 + b2_ref[...], 0.0)                      # (TB, 64) f32

    # Linear(64, 10), computed into a lane-dense 128-wide register tile.
    logits = jnp.dot(h2.astype(jnp.bfloat16), w3_ref[...],
                     preferred_element_type=jnp.float32)
    logits = logits + b3_ref[...]                                # (TB, 128) f32
    # Padded columns carry a -1e30 bias: they never win the max and their
    # exp() is exactly 0, so the log-softmax over the first 10 columns is
    # identical to an unpadded computation.

    # LogSoftmax(dim=1), numerically stable, all in f32.
    m = jnp.max(logits, axis=-1, keepdims=True)
    shifted = logits - m
    lse = jnp.log(jnp.sum(jnp.exp(shifted), axis=-1, keepdims=True))

    # Store only the 10 real columns (block width == full output last dim).
    o_ref[...] = (shifted[:, :OUT_FEATURES] - lse).astype(o_ref.dtype)


def _round_up(n, m):
    return ((n + m - 1) // m) * m


def _choose_tile_b(B):
    """Batch tile: multiple of 8 sublanes, >=2 grid steps when the batch is
    large enough (v7x megacore), tiles >=MIN_TILE_B rows where possible, and
    capped at TILE_B_MAX so the f32 x double-buffer fits every generation's
    scoped VMEM."""
    half = _round_up(pl.cdiv(B, 2), 8)                 # split across 2 TCs
    floor = min(MIN_TILE_B, _round_up(B, 8))           # don't exceed the batch
    return min(TILE_B_MAX, max(floor, half))


def prepare_params(params):
    """One-time parameter prep (hoisted out of the per-call forward):
    bf16 weight casts for single-pass MXU matmuls, and padding of the last
    layer to a lane-dense 128-wide register tile (padded bias = -1e30)."""
    w1, b1, w2, b2, w3, b3 = params
    w3p = jnp.zeros((H2, OUT_PAD), jnp.float32).at[:, :OUT_FEATURES].set(w3)
    b3p = jnp.full((1, OUT_PAD), NEG_BIG, jnp.float32).at[:, :OUT_FEATURES].set(b3)
    return (w1.astype(jnp.bfloat16), b1,
            w2.astype(jnp.bfloat16), b2,
            w3p.astype(jnp.bfloat16), b3p)


def neural_network_forward(x, prepared_params):
    """x: (B, 1, 28, 28) float32. Returns (B, 10) float32 log-softmax values.

    `prepared_params` comes from prepare_params() (bf16 weights, padded w3/b3).
    """
    w1b, b1, w2b, b2, w3b, b3p = prepared_params
    B = x.shape[0]

    # nn.Flatten() on NCHW; stays float32 (cast to bf16 happens in-kernel).
    x_flat = x.reshape(B, -1)                                    # (B, 784) f32

    tile_b = _choose_tile_b(B)
    grid = (pl.cdiv(B, tile_b),)

    out = pl.pallas_call(
        mlp_logsoftmax_kernel,
        out_shape=jax.ShapeDtypeStruct((B, OUT_FEATURES), jnp.float32),
        grid=grid,
        in_specs=[
            pl.BlockSpec((tile_b, IN_FEATURES), lambda i: (i, 0)),   # x tile (f32)
            pl.BlockSpec((IN_FEATURES, H1), lambda i: (0, 0)),       # w1 (resident)
            pl.BlockSpec((1, H1), lambda i: (0, 0)),                 # b1
            pl.BlockSpec((H1, H2), lambda i: (0, 0)),                # w2
            pl.BlockSpec((1, H2), lambda i: (0, 0)),                 # b2
            pl.BlockSpec((H2, OUT_PAD), lambda i: (0, 0)),           # w3 (padded)
            pl.BlockSpec((1, OUT_PAD), lambda i: (0, 0)),            # b3 (padded)
        ],
        out_specs=pl.BlockSpec((tile_b, OUT_FEATURES), lambda i: (i, 0)),
        compiler_params=pltpu.CompilerParams(
            dimension_semantics=("parallel",),       # batch rows independent
            vmem_limit_bytes=VMEM_LIMIT_BYTES),
    )(x_flat, w1b, b1, w2b, b2, w3b, b3p)

    return out


def init_params(key):
    """Deterministic init mirroring nn.Linear default (U(-1/sqrt(fan_in), +)).

    Weights are stored pre-transposed as (in, out) so the kernel does x @ W.
    Biases are kept 2-D (1, out) for clean TPU broadcasting.
    """
    dims = [(IN_FEATURES, H1), (H1, H2), (H2, OUT_FEATURES)]
    params = []
    keys = jax.random.split(key, 2 * len(dims))
    for i, (fan_in, fan_out) in enumerate(dims):
        bound = 1.0 / jnp.sqrt(float(fan_in))
        w = jax.random.uniform(keys[2 * i], (fan_in, fan_out),
                               minval=-bound, maxval=bound, dtype=jnp.float32)
        b = jax.random.uniform(keys[2 * i + 1], (1, fan_out),
                               minval=-bound, maxval=bound, dtype=jnp.float32)
        params += [w, b]
    return tuple(params)


def reference_forward(x, params):
    """Pure-JAX float32 reference of the PyTorch module's forward pass."""
    w1, b1, w2, b2, w3, b3 = params
    h = x.reshape(x.shape[0], -1)
    h = jnp.maximum(h @ w1 + b1, 0.0)
    h = jnp.maximum(h @ w2 + b2, 0.0)
    logits = h @ w3 + b3
    return jax.nn.log_softmax(logits, axis=-1)


if __name__ == "__main__":
    key = jax.random.PRNGKey(0)
    pkey, xkey = jax.random.split(key)

    params = init_params(pkey)
    prepared = prepare_params(params)           # one-time weight prep
    # Small batch of MNIST-like inputs, NCHW: (batch=2, C=1, 28, 28)
    x = jax.random.normal(xkey, (2, 1, 28, 28), dtype=jnp.float32)

    forward = jax.jit(neural_network_forward)
    out = forward(x, prepared)
    out = jax.block_until_ready(out)

    assert out.shape == (2, 10), out.shape
    # log_softmax rows should (approximately) sum to 1 in prob space
    assert jnp.allclose(jnp.sum(jnp.exp(out), axis=1), 1.0, atol=1e-4)
    assert bool(jnp.all(jnp.isfinite(out)))
    # bf16 matmuls with f32 accumulation: loose tolerance vs f32 reference.
    ref = reference_forward(x, params)
    assert jnp.allclose(out, ref, atol=1e-1, rtol=1e-1), (out, ref)

    print("KERNEL_OK")
</pallas_src>

<mosaic_0001>
module attributes {stable_mosaic.version = 11 : i64} {
  func.func @mlp_logsoftmax_kernel(%arg0: i32, %arg1: memref<8x784xf32, #tpu.memory_space<vmem>>, %arg2: memref<784x128xbf16, #tpu.memory_space<vmem>>, %arg3: memref<1x128xf32, #tpu.memory_space<vmem>>, %arg4: memref<128x64xbf16, #tpu.memory_space<vmem>>, %arg5: memref<1x64xf32, #tpu.memory_space<vmem>>, %arg6: memref<64x128xbf16, #tpu.memory_space<vmem>>, %arg7: memref<1x128xf32, #tpu.memory_space<vmem>>, %arg8: memref<8x10xf32, #tpu.memory_space<vmem>>) attributes {dimension_semantics = [#tpu.dimension_semantics<parallel>], iteration_bounds = array<i64: 1>, scalar_prefetch = 0 : i64, scratch_operands = 0 : i64, tpu.core_type = #tpu.core_type<tc>, window_params = [{transform_indices = @transform_0, window_bounds = array<i64: 8, 784>}, {pipeline_mode = #tpu.pipeline_mode<synchronous>, transform_indices = @transform_1, window_bounds = array<i64: 784, 128>}, {pipeline_mode = #tpu.pipeline_mode<synchronous>, transform_indices = @transform_2, window_bounds = array<i64: 1, 128>}, {pipeline_mode = #tpu.pipeline_mode<synchronous>, transform_indices = @transform_3, window_bounds = array<i64: 128, 64>}, {pipeline_mode = #tpu.pipeline_mode<synchronous>, transform_indices = @transform_4, window_bounds = array<i64: 1, 64>}, {pipeline_mode = #tpu.pipeline_mode<synchronous>, transform_indices = @transform_5, window_bounds = array<i64: 64, 128>}, {pipeline_mode = #tpu.pipeline_mode<synchronous>, transform_indices = @transform_6, window_bounds = array<i64: 1, 128>}, {transform_indices = @transform_7, window_bounds = array<i64: 8, 10>}]} {
    %c0 = arith.constant 0 : index
    %c0_0 = arith.constant 0 : index
    %0 = vector.load %arg1[%c0, %c0_0] : memref<8x784xf32, #tpu.memory_space<vmem>>, vector<8x784xf32>
    %1 = arith.truncf %0 : vector<8x784xf32> to vector<8x784xbf16>
    %c0_1 = arith.constant 0 : index
    %c0_2 = arith.constant 0 : index
    %2 = vector.load %arg2[%c0_1, %c0_2] : memref<784x128xbf16, #tpu.memory_space<vmem>>, vector<784x128xbf16>
    %cst = arith.constant dense<0.000000e+00> : vector<8x128xf32>
    %3 = tpu.matmul %1, %2, %cst {dimension_numbers = #tpu.dot_dimension_numbers<[1], [0], [0], [1], [0, 0, 1, 1], [], []>} : vector<8x784xbf16>, vector<784x128xbf16>, vector<8x128xf32> -> vector<8x128xf32>
    %c0_3 = arith.constant 0 : index
    %c0_4 = arith.constant 0 : index
    %4 = vector.load %arg3[%c0_3, %c0_4] : memref<1x128xf32, #tpu.memory_space<vmem>>, vector<1x128xf32>
    %5 = vector.broadcast %4 : vector<1x128xf32> to vector<8x128xf32>
    %6 = arith.addf %3, %5 : vector<8x128xf32>
    %cst_5 = arith.constant 0.000000e+00 : f32
    %7 = vector.broadcast %cst_5 : f32 to vector<8x128xf32>
    %8 = arith.maximumf %6, %7 : vector<8x128xf32>
    %9 = arith.truncf %8 : vector<8x128xf32> to vector<8x128xbf16>
    %c0_6 = arith.constant 0 : index
    %c0_7 = arith.constant 0 : index
    %10 = vector.load %arg4[%c0_6, %c0_7] : memref<128x64xbf16, #tpu.memory_space<vmem>>, vector<128x64xbf16>
    %cst_8 = arith.constant dense<0.000000e+00> : vector<8x64xf32>
    %11 = tpu.matmul %9, %10, %cst_8 {dimension_numbers = #tpu.dot_dimension_numbers<[1], [0], [0], [1], [0, 0, 1, 1], [], []>} : vector<8x128xbf16>, vector<128x64xbf16>, vector<8x64xf32> -> vector<8x64xf32>
    %c0_9 = arith.constant 0 : index
    %c0_10 = arith.constant 0 : index
    %12 = vector.load %arg5[%c0_9, %c0_10] : memref<1x64xf32, #tpu.memory_space<vmem>>, vector<1x64xf32>
    %13 = vector.broadcast %12 : vector<1x64xf32> to vector<8x64xf32>
    %14 = arith.addf %11, %13 : vector<8x64xf32>
    %cst_11 = arith.constant 0.000000e+00 : f32
    %15 = vector.broadcast %cst_11 : f32 to vector<8x64xf32>
    %16 = arith.maximumf %14, %15 : vector<8x64xf32>
    %17 = arith.truncf %16 : vector<8x64xf32> to vector<8x64xbf16>
    %c0_12 = arith.constant 0 : index
    %c0_13 = arith.constant 0 : index
    %18 = vector.load %arg6[%c0_12, %c0_13] : memref<64x128xbf16, #tpu.memory_space<vmem>>, vector<64x128xbf16>
    %cst_14 = arith.constant dense<0.000000e+00> : vector<8x128xf32>
    %19 = tpu.matmul %17, %18, %cst_14 {dimension_numbers = #tpu.dot_dimension_numbers<[1], [0], [0], [1], [0, 0, 1, 1], [], []>} : vector<8x64xbf16>, vector<64x128xbf16>, vector<8x128xf32> -> vector<8x128xf32>
    %c0_15 = arith.constant 0 : index
    %c0_16 = arith.constant 0 : index
    %20 = vector.load %arg7[%c0_15, %c0_16] : memref<1x128xf32, #tpu.memory_space<vmem>>, vector<1x128xf32>
    %21 = vector.broadcast %20 : vector<1x128xf32> to vector<8x128xf32>
    %22 = arith.addf %19, %21 : vector<8x128xf32>
    %cst_17 = arith.constant dense<0xFF800000> : vector<8xf32>
    %23 = vector.multi_reduction <maximumf>, %22, %cst_17 [1] : vector<8x128xf32> to vector<8xf32>
    %24 = vector.shape_cast %23 : vector<8xf32> to vector<8x1xf32>
    %25 = vector.broadcast %24 : vector<8x1xf32> to vector<8x128xf32>
    %26 = arith.subf %22, %25 : vector<8x128xf32>
    %27 = math.exp %26 : vector<8x128xf32>
    %cst_18 = arith.constant dense<0.000000e+00> : vector<8xf32>
    %28 = vector.multi_reduction <add>, %27, %cst_18 [1] : vector<8x128xf32> to vector<8xf32>
    %29 = vector.shape_cast %28 : vector<8xf32> to vector<8x1xf32>
    %30 = math.log %29 : vector<8x1xf32>
    %31 = vector.extract_strided_slice %26 {offsets = [0, 0], sizes = [8, 10], strides = [1, 1]} : vector<8x128xf32> to vector<8x10xf32>
    %32 = vector.broadcast %30 : vector<8x1xf32> to vector<8x10xf32>
    %33 = arith.subf %31, %32 : vector<8x10xf32>
    %c0_19 = arith.constant 0 : index
    %c0_20 = arith.constant 0 : index
    %34 = vector.load %arg8[%c0_19, %c0_20] : memref<8x10xf32, #tpu.memory_space<vmem>>, vector<8x10xf32>
    tpu.vector_store %arg8[%c0_19, %c0_20], %33 {strides = array<i32>} : memref<8x10xf32, #tpu.memory_space<vmem>>, vector<8x10xf32>,
    return
  }
  func.func @transform_0(%arg0: i32) -> (i32, i32) {
    %c0_i32 = arith.constant 0 : i32
    %c0_i32_0 = arith.constant 0 : i32
    return %arg0, %c0_i32 : i32, i32
  }
  func.func @transform_1(%arg0: i32) -> (i32, i32) {
    %c0_i32 = arith.constant 0 : i32
    %c0_i32_0 = arith.constant 0 : i32
    %c0_i32_1 = arith.constant 0 : i32
    return %c0_i32, %c0_i32_0 : i32, i32
  }
  func.func @transform_2(%arg0: i32) -> (i32, i32) {
    %c0_i32 = arith.constant 0 : i32
    %c0_i32_0 = arith.constant 0 : i32
    %c0_i32_1 = arith.constant 0 : i32
    return %c0_i32, %c0_i32_0 : i32, i32
  }
  func.func @transform_3(%arg0: i32) -> (i32, i32) {
    %c0_i32 = arith.constant 0 : i32
    %c0_i32_0 = arith.constant 0 : i32
    %c0_i32_1 = arith.constant 0 : i32
    return %c0_i32, %c0_i32_0 : i32, i32
  }
  func.func @transform_4(%arg0: i32) -> (i32, i32) {
    %c0_i32 = arith.constant 0 : i32
    %c0_i32_0 = arith.constant 0 : i32
    %c0_i32_1 = arith.constant 0 : i32
    return %c0_i32, %c0_i32_0 : i32, i32
  }
  func.func @transform_5(%arg0: i32) -> (i32, i32) {
    %c0_i32 = arith.constant 0 : i32
    %c0_i32_0 = arith.constant 0 : i32
    %c0_i32_1 = arith.constant 0 : i32
    return %c0_i32, %c0_i32_0 : i32, i32
  }
  func.func @transform_6(%arg0: i32) -> (i32, i32) {
    %c0_i32 = arith.constant 0 : i32
    %c0_i32_0 = arith.constant 0 : i32
    %c0_i32_1 = arith.constant 0 : i32
    return %c0_i32, %c0_i32_0 : i32, i32
  }
  func.func @transform_7(%arg0: i32) -> (i32, i32) {
    %c0_i32 = arith.constant 0 : i32
    %c0_i32_0 = arith.constant 0 : i32
    return %arg0, %c0_i32 : i32, i32
  }
}

</mosaic_0001>

<llo_original>
// kernel: neural_network_forward.1
$region0: #{neural_network_forward.1}
  #allocation0 [shape = 'u32[]', space=smem, size = 0x4, offset = 0x4, fixed_abs, tag = 'smem constant byte address 0x4 - core index']
  #allocation1 [shape = 'u32[144,128]{1,0:T(1,128)}', space=vmem, size = 0x12000, scoped, tag = 'internal scratch']
  %s0 = inlined_call_operand.vmem [shape: f32[2,784], index: 0, kind: input, shape index: {}]
  %s1 = inlined_call_operand.hbm [shape: bf16[784,128], index: 1, kind: input, shape index: {}]
  %s2 = inlined_call_operand.vmem [shape: f32[1,128], index: 2, kind: input, shape index: {}]
  %s3 = inlined_call_operand.vmem [shape: bf16[128,64], index: 3, kind: input, shape index: {}]
  %s4 = inlined_call_operand.vmem [shape: f32[1,64], index: 4, kind: input, shape index: {}]
  %s5 = inlined_call_operand.vmem [shape: bf16[64,128], index: 5, kind: input, shape index: {}]
  %s6 = inlined_call_operand.vmem [shape: f32[1,128], index: 6, kind: input, shape index: {}]
  %s7 = inlined_call_operand.hbm [shape: f32[2,10], index: 7, kind: output, shape index: {}]
  %s8 = sld [smem:[#allocation0]]
  $region42: #{neural_network_forward.1} parent=0
    _
  %s10 = ssub.s32 1, %s8
  %s11 = scalar_select 0, %s10, %s8
  $region1: #{neural_network_forward.1} parent=0
    #allocation2 [shape = 'u8[200704]{0}', space=vmem, size = 0x31000, scoped, tag = 'input window, operand 1, single buffered']
    #allocation3 [shape = 's32[1]{0}', space=sflag, size = 0x4, scoped, tag = 'scoped memory for neural_network_forward.1']
    #allocation4 [shape = 's32[1]{0}', space=sflag, size = 0x4, scoped, tag = 'scoped memory for neural_network_forward.1']
    #allocation5 [shape = 'u8[4096]{0}', space=vmem, size = 0x1000, scoped, tag = 'output window, operand 0, single buffered']
    %12 = vsyncpa [#allocation3], 0
    %13 = vsyncpa [#allocation4], 0
    // Predicated region
    $region2: #{neural_network_forward.1} parent=1 // pred_check
      _
    $region3: #{neural_network_forward.1} parent=1 // pred_check_branch
      %15 = sbr.rel (0) target = $region5
    $region4: #{neural_network_forward.1} parent=1 // pred_region
      _
    $region5: #{neural_network_forward.1} parent=1 // pred_fallthru
      _
    // Predicated region
    $region6: #{neural_network_forward.1} parent=1 // pred_check
      _
    $region7: #{neural_network_forward.1} parent=1 // pred_check_branch
      %17 = sbr.rel (0) target = $region9
    $region8: #{neural_network_forward.1} parent=1 // pred_region
      %s19 = ssub.s32 6272, 6272
      %20 = vsyncadd [#allocation3], %s19
      %s21 = sshll.u32 [#allocation2], 4
      %s22 = int_to_ptr.vmem [resolvable:$true] %s21
      %27 = dma.hbm_to_vmem [thread:$0]  %s1, 6272, %s22, [#allocation3], 64, 64, 4
    $region9: #{neural_network_forward.1} parent=1 // pred_fallthru
      _
    // Predicated region
    $region10: #{neural_network_forward.1} parent=1 // pred_check
      _
    $region11: #{neural_network_forward.1} parent=1 // pred_check_branch
      %29 = sbr.rel (0) target = $region13
    $region12: #{neural_network_forward.1} parent=1 // pred_region
      _
    $region13: #{neural_network_forward.1} parent=1 // pred_fallthru
      _
    // Predicated region
    $region14: #{neural_network_forward.1} parent=1 // pred_check
      _
    $region15: #{neural_network_forward.1} parent=1 // pred_check_branch
      %31 = sbr.rel (0) target = $region17
    $region16: #{neural_network_forward.1} parent=1 // pred_region
      _
    $region17: #{neural_network_forward.1} parent=1 // pred_fallthru
      _
    // Predicated region
    $region18: #{neural_network_forward.1} parent=1 // pred_check
      _
    $region19: #{neural_network_forward.1} parent=1 // pred_check_branch
      %33 = sbr.rel (0) target = $region21
    $region20: #{neural_network_forward.1} parent=1 // pred_region
      _
    $region21: #{neural_network_forward.1} parent=1 // pred_fallthru
      _
    // Predicated region
    $region22: #{neural_network_forward.1} parent=1 // pred_check
      _
    $region23: #{neural_network_forward.1} parent=1 // pred_check_branch
      %35 = sbr.rel (0) target = $region25
    $region24: #{neural_network_forward.1} parent=1 // pred_region
      _
    $region25: #{neural_network_forward.1} parent=1 // pred_fallthru
      _
    // Predicated region
    $region26: #{neural_network_forward.1} parent=1 // pred_check
      _
    $region27: #{neural_network_forward.1} parent=1 // pred_check_branch
      %37 = sbr.rel (0) target = $region29
    $region28: #{neural_network_forward.1} parent=1 // pred_region
      _
    $region29: #{neural_network_forward.1} parent=1 // pred_fallthru
      _
    // Predicated region
    $region30: #{neural_network_forward.1} parent=1 // pred_check
      _
    $region31: #{neural_network_forward.1} parent=1 // pred_check_branch
      %39 = sbr.rel (0) target = $region33
    $region32: #{neural_network_forward.1} parent=1 // pred_region
      %40 = dma.done [#allocation3], 6272
    $region33: #{neural_network_forward.1} parent=1 // pred_fallthru
      _
    %v42 = vld [vmem:[%s0] sm:$0xff]
    %v43 = vld [vmem:[%s0 + $0x8] sm:$0x3f]
    %v44 = vld [vmem:[%s0 + $0xe] sm:$0xff]
    %v45 = vld [vmem:[%s0 + $0x16] sm:$0x3f]
    %v46 = vld [vmem:[%s0 + $0x1c] sm:$0xff]
    %v47 = vld [vmem:[%s0 + $0x24] sm:$0x3f]
    %v48 = vld [vmem:[%s0 + $0x2a] sm:$0xff]
    %v49 = vld [vmem:[%s0 + $0x32] sm:$0x3f]
    %v58 = vcombine.low %v42, %v44
    %v59 = vcombine.high %v42, %v44
    %v60 = vcombine.low %v46, %v48
    %v61 = vcombine.high %v46, %v48
    %v63 = vunpack.c.l.s4 1983009808
    %v64 = vunpack.c.0.s8 %v63
    %v65 = vlaneseq
    %v66 = vshrl.u32 %v65, 7
    %v67 = vsub.s32 %v64, %v66
    %v68 = vrot.slane %v58, %v67
    %v70 = vunpack.c.l.s4 1983009808
    %v71 = vunpack.c.0.s8 %v70
    %v72 = vlaneseq
    %v73 = vshrl.u32 %v72, 7
    %v74 = vsub.s32 %v71, %v73
    %v75 = vrot.slane %v59, %v74
    %v77 = vunpack.c.l.s4 1983009808
    %v78 = vunpack.c.0.s8 %v77
    %v79 = vlaneseq
    %v80 = vshrl.u32 %v79, 7
    %v81 = vsub.s32 %v78, %v80
    %v82 = vrot.slane %v60, %v81
    %v84 = vunpack.c.l.s4 1983009808
    %v85 = vunpack.c.0.s8 %v84
    %v86 = vlaneseq
    %v87 = vshrl.u32 %v86, 7
    %v88 = vsub.s32 %v85, %v87
    %v89 = vrot.slane %v61, %v88
    %v90 = vcombine.low %v68, %v82
    %v91 = vcombine.high %v68, %v82
    %v92 = vcombine.low %v75, %v89
    %v93 = vcombine.high %v75, %v89
    %v94 = vcombine.low %v43, %v45
    %v95 = vcombine.high %v43, %v45
    %v96 = vcombine.low %v47, %v49
    %v97 = vcombine.high %v47, %v49
    %v99 = vunpack.c.l.s4 1983009808
    %v100 = vunpack.c.0.s8 %v99
    %v101 = vlaneseq
    %v102 = vshrl.u32 %v101, 7
    %v103 = vsub.s32 %v100, %v102
    %v104 = vrot.slane %v94, %v103
    %v106 = vunpack.c.l.s4 1983009808
    %v107 = vunpack.c.0.s8 %v106
    %v108 = vlaneseq
    %v109 = vshrl.u32 %v108, 7
    %v110 = vsub.s32 %v107, %v109
    %v111 = vrot.slane %v95, %v110
    %v113 = vunpack.c.l.s4 1983009808
    %v114 = vunpack.c.0.s8 %v113
    %v115 = vlaneseq
    %v116 = vshrl.u32 %v115, 7
    %v117 = vsub.s32 %v114, %v116
    %v118 = vrot.slane %v96, %v117
    %v120 = vunpack.c.l.s4 1983009808
    %v121 = vunpack.c.0.s8 %v120
    %v122 = vlaneseq
    %v123 = vshrl.u32 %v122, 7
    %v124 = vsub.s32 %v121, %v123
    %v125 = vrot.slane %v97, %v124
    %v126 = vcombine.low %v104, %v118
    %v127 = vcombine.high %v104, %v118
    %v128 = vcombine.low %v111, %v125
    %v136 = vpack.c.bf16 %v90, %v90
    %v137 = vpack.c.bf16 %v91, %v91
    %v138 = vpack.c.bf16 %v92, %v92
    %v139 = vpack.c.bf16 %v93, %v93
    %v140 = vpack.c.bf16 %v126, %v126
    %v141 = vpack.c.bf16 %v127, %v127
    %v142 = vpack.c.bf16 %v128, %v128
    %v143 = vld [vmem:[#allocation2] sm:$0xf]
    %v144 = vld [vmem:[#allocation2 + $0x4] sm:$0xf]
    %v145 = vld [vmem:[#allocation2 + $0x8] sm:$0xf]
    %v146 = vld [vmem:[#allocation2 + $0xc] sm:$0xf]
    %v147 = vld [vmem:[#allocation2 + $0x10] sm:$0xf]
    %v148 = vld [vmem:[#allocation2 + $0x14] sm:$0xf]
    %v149 = vld [vmem:[#allocation2 + $0x18] sm:$0xf]
    %v150 = vld [vmem:[#allocation2 + $0x1c] sm:$0xf]
    %v151 = vld [vmem:[#allocation2 + $0x20] sm:$0xf]
    %v152 = vld [vmem:[#allocation2 + $0x24] sm:$0xf]
    %v153 = vld [vmem:[#allocation2 + $0x28] sm:$0xf]
    %v154 = vld [vmem:[#allocation2 + $0x2c] sm:$0xf]
    %v155 = vld [vmem:[#allocation2 + $0x30] sm:$0xf]
    %v156 = vld [vmem:[#allocation2 + $0x34] sm:$0xf]
    %v157 = vld [vmem:[#allocation2 + $0x38] sm:$0xf]
    %v158 = vld [vmem:[#allocation2 + $0x3c] sm:$0xf]
    %v159 = vld [vmem:[#allocation2 + $0x40] sm:$0xf]
    %v160 = vld [vmem:[#allocation2 + $0x44] sm:$0xf]
    %v161 = vld [vmem:[#allocation2 + $0x48] sm:$0xf]
    %v162 = vld [vmem:[#allocation2 + $0x4c] sm:$0xf]
    %v163 = vld [vmem:[#allocation2 + $0x50] sm:$0xf]
    %v164 = vld [vmem:[#allocation2 + $0x54] sm:$0xf]
    %v165 = vld [vmem:[#allocation2 + $0x58] sm:$0xf]
    %v166 = vld [vmem:[#allocation2 + $0x5c] sm:$0xf]
    %v167 = vld [vmem:[#allocation2 + $0x60] sm:$0xf]
    %v168 = vld [vmem:[#allocation2 + $0x64] sm:$0xf]
    %v169 = vld [vmem:[#allocation2 + $0x68] sm:$0xf]
    %v170 = vld [vmem:[#allocation2 + $0x6c] sm:$0xf]
    %v171 = vld [vmem:[#allocation2 + $0x70] sm:$0xf]
    %v172 = vld [vmem:[#allocation2 + $0x74] sm:$0xf]
    %v173 = vld [vmem:[#allocation2 + $0x78] sm:$0xf]
    %v174 = vld [vmem:[#allocation2 + $0x7c] sm:$0xf]
    %v175 = vld [vmem:[#allocation2 + $0x80] sm:$0xf]
    %v176 = vld [vmem:[#allocation2 + $0x84] sm:$0xf]
    %v177 = vld [vmem:[#allocation2 + $0x88] sm:$0xf]
    %v178 = vld [vmem:[#allocation2 + $0x8c] sm:$0xf]
    %v179 = vld [vmem:[#allocation2 + $0x90] sm:$0xf]
    %v180 = vld [vmem:[#allocation2 + $0x94] sm:$0xf]
    %v181 = vld [vmem:[#allocation2 + $0x98] sm:$0xf]
    %v182 = vld [vmem:[#allocation2 + $0x9c] sm:$0xf]
    %v183 = vld [vmem:[#allocation2 + $0xa0] sm:$0xf]
    %v184 = vld [vmem:[#allocation2 + $0xa4] sm:$0xf]
    %v185 = vld [vmem:[#allocation2 + $0xa8] sm:$0xf]
    %v186 = vld [vmem:[#allocation2 + $0xac] sm:$0xf]
    %v187 = vld [vmem:[#allocation2 + $0xb0] sm:$0xf]
    %v188 = vld [vmem:[#allocation2 + $0xb4] sm:$0xf]
    %v189 = vld [vmem:[#allocation2 + $0xb8] sm:$0xf]
    %v190 = vld [vmem:[#allocation2 + $0xbc] sm:$0xf]
    %v191 = vld [vmem:[#allocation2 + $0xc0] sm:$0xf]
    %v192 = vld [vmem:[#allocation2 + $0xc4] sm:$0xf]
    %v193 = vld [vmem:[#allocation2 + $0xc8] sm:$0xf]
    %v194 = vld [vmem:[#allocation2 + $0xcc] sm:$0xf]
    %v195 = vld [vmem:[#allocation2 + $0xd0] sm:$0xf]
    %v196 = vld [vmem:[#allocation2 + $0xd4] sm:$0xf]
    %v197 = vld [vmem:[#allocation2 + $0xd8] sm:$0xf]
    %v198 = vld [vmem:[#allocation2 + $0xdc] sm:$0xf]
    %v199 = vld [vmem:[#allocation2 + $0xe0] sm:$0xf]
    %v200 = vld [vmem:[#allocation2 + $0xe4] sm:$0xf]
    %v201 = vld [vmem:[#allocation2 + $0xe8] sm:$0xf]
    %v202 = vld [vmem:[#allocation2 + $0xec] sm:$0xf]
    %v203 = vld [vmem:[#allocation2 + $0xf0] sm:$0xf]
    %v204 = vld [vmem:[#allocation2 + $0xf4] sm:$0xf]
    %v205 = vld [vmem:[#allocation2 + $0xf8] sm:$0xf]
    %v206 = vld [vmem:[#allocation2 + $0xfc] sm:$0xf]
    %v207 = vld [vmem:[#allocation2 + $0x100] sm:$0xf]
    %v208 = vld [vmem:[#allocation2 + $0x104] sm:$0xf]
    %v209 = vld [vmem:[#allocation2 + $0x108] sm:$0xf]
    %v210 = vld [vmem:[#allocation2 + $0x10c] sm:$0xf]
    %v211 = vld [vmem:[#allocation2 + $0x110] sm:$0xf]
    %v212 = vld [vmem:[#allocation2 + $0x114] sm:$0xf]
    %v213 = vld [vmem:[#allocation2 + $0x118] sm:$0xf]
    %v214 = vld [vmem:[#allocation2 + $0x11c] sm:$0xf]
    %v215 = vld [vmem:[#allocation2 + $0x120] sm:$0xf]
    %v216 = vld [vmem:[#allocation2 + $0x124] sm:$0xf]
    %v217 = vld [vmem:[#allocation2 + $0x128] sm:$0xf]
    %v218 = vld [vmem:[#allocation2 + $0x12c] sm:$0xf]
    %v219 = vld [vmem:[#allocation2 + $0x130] sm:$0xf]
    %v220 = vld [vmem:[#allocation2 + $0x134] sm:$0xf]
    %v221 = vld [vmem:[#allocation2 + $0x138] sm:$0xf]
    %v222 = vld [vmem:[#allocation2 + $0x13c] sm:$0xf]
    %v223 = vld [vmem:[#allocation2 + $0x140] sm:$0xf]
    %v224 = vld [vmem:[#allocation2 + $0x144] sm:$0xf]
    %v225 = vld [vmem:[#allocation2 + $0x148] sm:$0xf]
    %v226 = vld [vmem:[#allocation2 + $0x14c] sm:$0xf]
    %v227 = vld [vmem:[#allocation2 + $0x150] sm:$0xf]
    %v228 = vld [vmem:[#allocation2 + $0x154] sm:$0xf]
    %v229 = vld [vmem:[#allocation2 + $0x158] sm:$0xf]
    %v230 = vld [vmem:[#allocation2 + $0x15c] sm:$0xf]
    %v231 = vld [vmem:[#allocation2 + $0x160] sm:$0xf]
    %v232 = vld [vmem:[#allocation2 + $0x164] sm:$0xf]
    %v233 = vld [vmem:[#allocation2 + $0x168] sm:$0xf]
    %v234 = vld [vmem:[#allocation2 + $0x16c] sm:$0xf]
    %v235 = vld [vmem:[#allocation2 + $0x170] sm:$0xf]
    %v236 = vld [vmem:[#allocation2 + $0x174] sm:$0xf]
    %v237 = vld [vmem:[#allocation2 + $0x178] sm:$0xf]
    %v238 = vld [vmem:[#allocation2 + $0x17c] sm:$0xf]
    %v239 = vld [vmem:[#allocation2 + $0x180] sm:$0xf]
    %v240 = vld [vmem:[#allocation2 + $0x184] sm:$0xf]
    %v241 = vld [vmem:[%s2] sm:$0x1]
    %v243 = vlaneseq
    %v244 = vshrl.u32 %v243, 7
    %v245 = vsub.s32 0, %v244
    %v246 = vrot.slane %v241, %v245
    %v346 = vunpack.c.l.b16 %v143
    %v347 = vunpack.c.l.b16 %v144
    %v348 = vunpack.c.l.b16 %v145
    %v349 = vunpack.c.l.b16 %v146
    %v350 = vunpack.c.l.b16 %v147
    %v351 = vunpack.c.l.b16 %v148
    %v352 = vunpack.c.l.b16 %v149
    %v353 = vunpack.c.l.b16 %v150
    %v354 = vunpack.c.l.b16 %v151
    %v355 = vunpack.c.l.b16 %v152
    %v356 = vunpack.c.l.b16 %v153
    %v357 = vunpack.c.l.b16 %v154
    %v358 = vunpack.c.l.b16 %v155
    %v359 = vunpack.c.l.b16 %v156
    %v360 = vunpack.c.l.b16 %v157
    %v361 = vunpack.c.l.b16 %v158
    %v362 = vunpack.c.l.b16 %v159
    %v363 = vunpack.c.l.b16 %v160
    %v364 = vunpack.c.l.b16 %v161
    %v365 = vunpack.c.l.b16 %v162
    %v366 = vunpack.c.l.b16 %v163
    %v367 = vunpack.c.l.b16 %v164
    %v368 = vunpack.c.l.b16 %v165
    %v369 = vunpack.c.l.b16 %v166
    %v370 = vunpack.c.l.b16 %v167
    %v371 = vunpack.c.l.b16 %v168
    %v372 = vunpack.c.l.b16 %v169
    %v373 = vunpack.c.l.b16 %v170
    %v374 = vunpack.c.l.b16 %v171
    %v375 = vunpack.c.l.b16 %v172
    %v376 = vunpack.c.l.b16 %v173
    %v377 = vunpack.c.l.b16 %v174
    %v378 = vunpack.c.l.b16 %v175
    %v379 = vunpack.c.l.b16 %v176
    %v380 = vunpack.c.l.b16 %v177
    %v381 = vunpack.c.l.b16 %v178
    %v382 = vunpack.c.l.b16 %v179
    %v383 = vunpack.c.l.b16 %v180
    %v384 = vunpack.c.l.b16 %v181
    %v385 = vunpack.c.l.b16 %v182
    %v386 = vunpack.c.l.b16 %v183
    %v387 = vunpack.c.l.b16 %v184
    %v388 = vunpack.c.l.b16 %v185
    %v389 = vunpack.c.l.b16 %v186
    %v390 = vunpack.c.l.b16 %v187
    %v391 = vunpack.c.l.b16 %v188
    %v392 = vunpack.c.l.b16 %v189
    %v393 = vunpack.c.l.b16 %v190
    %v394 = vunpack.c.l.b16 %v191
    %v395 = vunpack.c.l.b16 %v192
    %v396 = vunpack.c.l.b16 %v193
    %v397 = vunpack.c.l.b16 %v194
    %v398 = vunpack.c.l.b16 %v195
    %v399 = vunpack.c.l.b16 %v196
    %v400 = vunpack.c.l.b16 %v197
    %v401 = vunpack.c.l.b16 %v198
    %v402 = vunpack.c.l.b16 %v199
    %v403 = vunpack.c.l.b16 %v200
    %v404 = vunpack.c.l.b16 %v201
    %v405 = vunpack.c.l.b16 %v202
    %v406 = vunpack.c.l.b16 %v203
    %v407 = vunpack.c.l.b16 %v204
    %v408 = vunpack.c.l.b16 %v205
    %v409 = vunpack.c.l.b16 %v206
    %v410 = vunpack.c.l.b16 %v207
    %v411 = vunpack.c.l.b16 %v208
    %v412 = vunpack.c.l.b16 %v209
    %v413 = vunpack.c.l.b16 %v210
    %v414 = vunpack.c.l.b16 %v211
    %v415 = vunpack.c.l.b16 %v212
    %v416 = vunpack.c.l.b16 %v213
    %v417 = vunpack.c.l.b16 %v214
    %v418 = vunpack.c.l.b16 %v215
    %v419 = vunpack.c.l.b16 %v216
    %v420 = vunpack.c.l.b16 %v217
    %v421 = vunpack.c.l.b16 %v218
    %v422 = vunpack.c.l.b16 %v219
    %v423 = vunpack.c.l.b16 %v220
    %v424 = vunpack.c.l.b16 %v221
    %v425 = vunpack.c.l.b16 %v222
    %v426 = vunpack.c.l.b16 %v223
    %v427 = vunpack.c.l.b16 %v224
    %v428 = vunpack.c.l.b16 %v225
    %v429 = vunpack.c.l.b16 %v226
    %v430 = vunpack.c.l.b16 %v227
    %v431 = vunpack.c.l.b16 %v228
    %v432 = vunpack.c.l.b16 %v229
    %v433 = vunpack.c.l.b16 %v230
    %v434 = vunpack.c.l.b16 %v231
    %v435 = vunpack.c.l.b16 %v232
    %v436 = vunpack.c.l.b16 %v233
    %v437 = vunpack.c.l.b16 %v234
    %v438 = vunpack.c.l.b16 %v235
    %v439 = vunpack.c.l.b16 %v236
    %v440 = vunpack.c.l.b16 %v237
    %v441 = vunpack.c.l.b16 %v238
    %v442 = vunpack.c.l.b16 %v239
    %v443 = vunpack.c.l.b16 %v240
    %v444 = vpack.c.b16 %v347, %v346
    %v445 = vpack.c.b16 %v349, %v348
    %v446 = vpack.c.b16 %v351, %v350
    %v447 = vpack.c.b16 %v353, %v352
    %v448 = vpack.c.b16 %v355, %v354
    %v449 = vpack.c.b16 %v357, %v356
    %v450 = vpack.c.b16 %v359, %v358
    %v451 = vpack.c.b16 %v361, %v360
    %v452 = vpack.c.b16 %v363, %v362
    %v453 = vpack.c.b16 %v365, %v364
    %v454 = vpack.c.b16 %v367, %v366
    %v455 = vpack.c.b16 %v369, %v368
    %v456 = vpack.c.b16 %v371, %v370
    %v457 = vpack.c.b16 %v373, %v372
    %v458 = vpack.c.b16 %v375, %v374
    %v459 = vpack.c.b16 %v377, %v376
    %v460 = vpack.c.b16 %v379, %v378
    %v461 = vpack.c.b16 %v381, %v380
    %v462 = vpack.c.b16 %v383, %v382
    %v463 = vpack.c.b16 %v385, %v384
    %v464 = vpack.c.b16 %v387, %v386
    %v465 = vpack.c.b16 %v389, %v388
    %v466 = vpack.c.b16 %v391, %v390
    %v467 = vpack.c.b16 %v393, %v392
    %v468 = vpack.c.b16 %v395, %v394
    %v469 = vpack.c.b16 %v397, %v396
    %v470 = vpack.c.b16 %v399, %v398
    %v471 = vpack.c.b16 %v401, %v400
    %v472 = vpack.c.b16 %v403, %v402
    %v473 = vpack.c.b16 %v405, %v404
    %v474 = vpack.c.b16 %v407, %v406
    %v475 = vpack.c.b16 %v409, %v408
    %v476 = vpack.c.b16 %v411, %v410
    %v477 = vpack.c.b16 %v413, %v412
    %v478 = vpack.c.b16 %v415, %v414
    %v479 = vpack.c.b16 %v417, %v416
    %v480 = vpack.c.b16 %v419, %v418
    %v481 = vpack.c.b16 %v421, %v420
    %v482 = vpack.c.b16 %v423, %v422
    %v483 = vpack.c.b16 %v425, %v424
    %v484 = vpack.c.b16 %v427, %v426
    %v485 = vpack.c.b16 %v429, %v428
    %v486 = vpack.c.b16 %v431, %v430
    %v487 = vpack.c.b16 %v433, %v432
    %v488 = vpack.c.b16 %v435, %v434
    %v489 = vpack.c.b16 %v437, %v436
    %v490 = vpack.c.b16 %v439, %v438
    %v491 = vpack.c.b16 %v441, %v440
    %v492 = vpack.c.b16 %v443, %v442
    %vm542 = vcmask 130048
    %v544 = vsel %vm542, %v142, 0
    %546 = vmatprep.subr.bf16.mxu0 0
    %547 = vmatpush1.bf16.msra.mxu0 %v444
    %548 = vmatprep.subr.bf16.mxu0 0
    %549 = vmatpush1.bf16.msra.mxu0 %v445
    %550 = vmatprep.subr.bf16.mxu0 0
    %551 = vmatpush1.bf16.msra.mxu0 %v446
    %552 = vmatprep.subr.bf16.mxu0 0
    %553 = vmatpush1.bf16.msra.mxu0 %v447
    %554 = vmatprep.subr.bf16.mxu0 0
    %555 = vmatpush1.bf16.msra.mxu0 %v448
    %556 = vmatprep.subr.bf16.mxu0 0
    %557 = vmatpush1.bf16.msra.mxu0 %v449
    %558 = vmatprep.subr.bf16.mxu0 0
    %559 = vmatpush1.bf16.msra.mxu0 %v450
    %560 = vmatprep.subr.bf16.mxu0 0
    %561 = vmatpush1.bf16.msra.mxu0 %v451
    %562 = vmatprep.subr.bf16.mxu0 0
    %563 = vmatpush1.bf16.msra.mxu0 %v452
    %564 = vmatprep.subr.bf16.mxu0 0
    %565 = vmatpush1.bf16.msra.mxu0 %v453
    %566 = vmatprep.subr.bf16.mxu0 0
    %567 = vmatpush1.bf16.msra.mxu0 %v454
    %568 = vmatprep.subr.bf16.mxu0 0
    %569 = vmatpush1.bf16.msra.mxu0 %v455
    %570 = vmatprep.subr.bf16.mxu0 0
    %571 = vmatpush1.bf16.msra.mxu0 %v456
    %572 = vmatprep.subr.bf16.mxu0 0
    %573 = vmatpush1.bf16.msra.mxu0 %v457
    %574 = vmatprep.subr.bf16.mxu0 0
    %575 = vmatpush1.bf16.msra.mxu0 %v458
    %576 = vmatprep.subr.bf16.mxu0 0
    %577 = vmatpush1.bf16.msra.mxu0 %v459
    %578 = vmatprep.mubr.bf16.mxu0 %v137
    %579 = vmatmul.mubr.bf16.gmra.mrb[0].mxu0 %v136
    %v580 = vpop.f32.mrb[0].mxu0
    %v581 = vadd.f32 %v246, %v580
    %v582 = vpop.f32.mrb[0].mxu0
    %v583 = vpop.f32.mrb[0].mxu0
    %v584 = vpop.f32.mrb[0].mxu0
    %585 = vdwg.mxu0
    %586 = vmatprep.subr.bf16.mxu0 0
    %587 = vmatpush1.bf16.msra.mxu0 %v460
    %588 = vmatprep.subr.bf16.mxu0 0
    %589 = vmatpush1.bf16.msra.mxu0 %v461
    %590 = vmatprep.subr.bf16.mxu0 0
    %591 = vmatpush1.bf16.msra.mxu0 %v462
    %592 = vmatprep.subr.bf16.mxu0 0
    %593 = vmatpush1.bf16.msra.mxu0 %v463
    %594 = vmatprep.subr.bf16.mxu0 0
    %595 = vmatpush1.bf16.msra.mxu0 %v464
    %596 = vmatprep.subr.bf16.mxu0 0
    %597 = vmatpush1.bf16.msra.mxu0 %v465
    %598 = vmatprep.subr.bf16.mxu0 0
    %599 = vmatpush1.bf16.msra.mxu0 %v466
    %600 = vmatprep.subr.bf16.mxu0 0
    %601 = vmatpush1.bf16.msra.mxu0 %v467
    %602 = vmatprep.subr.bf16.mxu0 0
    %603 = vmatpush1.bf16.msra.mxu0 %v468
    %604 = vmatprep.subr.bf16.mxu0 0
    %605 = vmatpush1.bf16.msra.mxu0 %v469
    %606 = vmatprep.subr.bf16.mxu0 0
    %607 = vmatpush1.bf16.msra.mxu0 %v470
    %608 = vmatprep.subr.bf16.mxu0 0
    %609 = vmatpush1.bf16.msra.mxu0 %v471
    %610 = vmatprep.subr.bf16.mxu0 0
    %611 = vmatpush1.bf16.msra.mxu0 %v472
    %612 = vmatprep.subr.bf16.mxu0 0
    %613 = vmatpush1.bf16.msra.mxu0 %v473
    %614 = vmatprep.subr.bf16.mxu0 0
    %615 = vmatpush1.bf16.msra.mxu0 %v474
    %616 = vmatprep.subr.bf16.mxu0 0
    %617 = vmatpush1.bf16.msra.mxu0 %v475
    %618 = vmatprep.mubr.bf16.mxu0 %v139
    %619 = vmatmul.mubr.bf16.gmra.mrb[0].mxu0 %v138
    %v620 = vpop.f32.mrb[0].mxu0
    %v621 = vadd.f32 %v581, %v620
    %v622 = vpop.f32.mrb[0].mxu0
    %v623 = vpop.f32.mrb[0].mxu0
    %v624 = vpop.f32.mrb[0].mxu0
    %625 = vdwg.mxu0
    %626 = vmatprep.subr.bf16.mxu0 0
    %627 = vmatpush1.bf16.msra.mxu0 %v476
    %628 = vmatprep.subr.bf16.mxu0 0
    %629 = vmatpush1.bf16.msra.mxu0 %v477
    %630 = vmatprep.subr.bf16.mxu0 0
    %631 = vmatpush1.bf16.msra.mxu0 %v478
    %632 = vmatprep.subr.bf16.mxu0 0
    %633 = vmatpush1.bf16.msra.mxu0 %v479
    %634 = vmatprep.subr.bf16.mxu0 0
    %635 = vmatpush1.bf16.msra.mxu0 %v480
    %636 = vmatprep.subr.bf16.mxu0 0
    %637 = vmatpush1.bf16.msra.mxu0 %v481
    %638 = vmatprep.subr.bf16.mxu0 0
    %639 = vmatpush1.bf16.msra.mxu0 %v482
    %640 = vmatprep.subr.bf16.mxu0 0
    %641 = vmatpush1.bf16.msra.mxu0 %v483
    %642 = vmatprep.subr.bf16.mxu0 0
    %643 = vmatpush1.bf16.msra.mxu0 %v484
    %644 = vmatprep.subr.bf16.mxu0 0
    %645 = vmatpush1.bf16.msra.mxu0 %v485
    %646 = vmatprep.subr.bf16.mxu0 0
    %647 = vmatpush1.bf16.msra.mxu0 %v486
    %648 = vmatprep.subr.bf16.mxu0 0
    %649 = vmatpush1.bf16.msra.mxu0 %v487
    %650 = vmatprep.subr.bf16.mxu0 0
    %651 = vmatpush1.bf16.msra.mxu0 %v488
    %652 = vmatprep.subr.bf16.mxu0 0
    %653 = vmatpush1.bf16.msra.mxu0 %v489
    %654 = vmatprep.subr.bf16.mxu0 0
    %655 = vmatpush1.bf16.msra.mxu0 %v490
    %656 = vmatprep.subr.bf16.mxu0 0
    %657 = vmatpush1.bf16.msra.mxu0 %v491
    %658 = vmatprep.mubr.bf16.mxu0 %v141
    %659 = vmatmul.mubr.bf16.gmra.mrb[0].mxu0 %v140
    %v660 = vpop.f32.mrb[0].mxu0
    %v661 = vadd.f32 %v621, %v660
    %v662 = vpop.f32.mrb[0].mxu0
    %v663 = vpop.f32.mrb[0].mxu0
    %v664 = vpop.f32.mrb[0].mxu0
    %665 = vdwg.mxu0
    %666 = vmatprep.subr.bf16.mxu0 0
    %667 = vmatpush1.bf16.msra.mxu0 %v492
    %668 = vmatprep.subr.bf16.mxu0 0
    %669 = vmatpush1.bf16.msra.mxu0 0
    %670 = vmatprep.subr.bf16.mxu0 0
    %671 = vmatpush1.bf16.msra.mxu0 0
    %672 = vmatprep.subr.bf16.mxu0 0
    %673 = vmatpush1.bf16.msra.mxu0 0
    %674 = vmatprep.subr.bf16.mxu0 0
    %675 = vmatpush1.bf16.msra.mxu0 0
    %676 = vmatprep.subr.bf16.mxu0 0
    %677 = vmatpush1.bf16.msra.mxu0 0
    %678 = vmatprep.subr.bf16.mxu0 0
    %679 = vmatpush1.bf16.msra.mxu0 0
    %680 = vmatprep.subr.bf16.mxu0 0
    %681 = vmatpush1.bf16.msra.mxu0 0
    %682 = vmatprep.subr.bf16.mxu0 0
    %683 = vmatpush1.bf16.msra.mxu0 0
    %684 = vmatprep.subr.bf16.mxu0 0
    %685 = vmatpush1.bf16.msra.mxu0 0
    %686 = vmatprep.subr.bf16.mxu0 0
    %687 = vmatpush1.bf16.msra.mxu0 0
    %688 = vmatprep.subr.bf16.mxu0 0
    %689 = vmatpush1.bf16.msra.mxu0 0
    %690 = vmatprep.subr.bf16.mxu0 0
    %691 = vmatpush1.bf16.msra.mxu0 0
    %692 = vmatprep.subr.bf16.mxu0 0
    %693 = vmatpush1.bf16.msra.mxu0 0
    %694 = vmatprep.subr.bf16.mxu0 0
    %695 = vmatpush1.bf16.msra.mxu0 0
    %696 = vmatprep.subr.bf16.mxu0 0
    %697 = vmatpush1.bf16.msra.mxu0 0
    %698 = vmatprep.mubr.bf16.mxu0 0
    %699 = vmatmul.mubr.bf16.gmra.mrb[0].mxu0 %v544
    %v700 = vpop.f32.mrb[0].mxu0
    %v701 = vadd.f32 %v661, %v700
    %v702 = vpop.f32.mrb[0].mxu0
    %v703 = vpop.f32.mrb[0].mxu0
    %v704 = vpop.f32.mrb[0].mxu0
    %705 = vdwg.mxu0
    %v706 = vmax.f32 %v701, 0.0
    %v707 = vpack.c.bf16 %v706, %v706
    %v708 = vld [vmem:[%s3] sm:$0xf]
    %v709 = vld [vmem:[%s3 + $0x4] sm:$0xf]
    %v710 = vld [vmem:[%s3 + $0x8] sm:$0xf]
    %v711 = vld [vmem:[%s3 + $0xc] sm:$0xf]
    %v712 = vld [vmem:[%s3 + $0x10] sm:$0xf]
    %v713 = vld [vmem:[%s3 + $0x14] sm:$0xf]
    %v714 = vld [vmem:[%s3 + $0x18] sm:$0xf]
    %v715 = vld [vmem:[%s3 + $0x1c] sm:$0xf]
    %v716 = vld [vmem:[%s3 + $0x20] sm:$0xf]
    %v717 = vld [vmem:[%s3 + $0x24] sm:$0xf]
    %v718 = vld [vmem:[%s3 + $0x28] sm:$0xf]
    %v719 = vld [vmem:[%s3 + $0x2c] sm:$0xf]
    %v720 = vld [vmem:[%s3 + $0x30] sm:$0xf]
    %v721 = vld [vmem:[%s3 + $0x34] sm:$0xf]
    %v722 = vld [vmem:[%s3 + $0x38] sm:$0xf]
    %v723 = vld [vmem:[%s3 + $0x3c] sm:$0xf]
    %v724 = vld [vmem:[%s4] sm:$0x1]
    %v726 = vlaneseq
    %v727 = vshrl.u32 %v726, 7
    %v728 = vsub.s32 0, %v727
    %v729 = vrot.slane %v724, %v728
    %v747 = vunpack.c.l.b16 %v708
    %v748 = vunpack.c.l.b16 %v709
    %v749 = vunpack.c.l.b16 %v710
    %v750 = vunpack.c.l.b16 %v711
    %v751 = vunpack.c.l.b16 %v712
    %v752 = vunpack.c.l.b16 %v713
    %v753 = vunpack.c.l.b16 %v714
    %v754 = vunpack.c.l.b16 %v715
    %v755 = vunpack.c.l.b16 %v716
    %v756 = vunpack.c.l.b16 %v717
    %v757 = vunpack.c.l.b16 %v718
    %v758 = vunpack.c.l.b16 %v719
    %v759 = vunpack.c.l.b16 %v720
    %v760 = vunpack.c.l.b16 %v721
    %v761 = vunpack.c.l.b16 %v722
    %v762 = vunpack.c.l.b16 %v723
    %v763 = vpack.c.b16 %v748, %v747
    %v764 = vpack.c.b16 %v750, %v749
    %v765 = vpack.c.b16 %v752, %v751
    %v766 = vpack.c.b16 %v754, %v753
    %v767 = vpack.c.b16 %v756, %v755
    %v768 = vpack.c.b16 %v758, %v757
    %v769 = vpack.c.b16 %v760, %v759
    %v770 = vpack.c.b16 %v762, %v761
    %779 = vmatprep.subr.bf16.mxu0 0
    %780 = vmatpush1.bf16.msra.mxu0 %v763
    %781 = vmatprep.subr.bf16.mxu0 0
    %782 = vmatpush1.bf16.msra.mxu0 %v764
    %783 = vmatprep.subr.bf16.mxu0 0
    %784 = vmatpush1.bf16.msra.mxu0 %v765
    %785 = vmatprep.subr.bf16.mxu0 0
    %786 = vmatpush1.bf16.msra.mxu0 %v766
    %787 = vmatprep.subr.bf16.mxu0 0
    %788 = vmatpush1.bf16.msra.mxu0 %v767
    %789 = vmatprep.subr.bf16.mxu0 0
    %790 = vmatpush1.bf16.msra.mxu0 %v768
    %791 = vmatprep.subr.bf16.mxu0 0
    %792 = vmatpush1.bf16.msra.mxu0 %v769
    %793 = vmatprep.subr.bf16.mxu0 0
    %794 = vmatpush1.bf16.msra.mxu0 %v770
    %795 = vmatprep.subr.bf16.mxu0 0
    %796 = vmatpush1.bf16.msra.mxu0 0
    %797 = vmatprep.subr.bf16.mxu0 0
    %798 = vmatpush1.bf16.msra.mxu0 0
    %799 = vmatprep.subr.bf16.mxu0 0
    %800 = vmatpush1.bf16.msra.mxu0 0
    %801 = vmatprep.subr.bf16.mxu0 0
    %802 = vmatpush1.bf16.msra.mxu0 0
    %803 = vmatprep.subr.bf16.mxu0 0
    %804 = vmatpush1.bf16.msra.mxu0 0
    %805 = vmatprep.subr.bf16.mxu0 0
    %806 = vmatpush1.bf16.msra.mxu0 0
    %807 = vmatprep.subr.bf16.mxu0 0
    %808 = vmatpush1.bf16.msra.mxu0 0
    %809 = vmatprep.subr.bf16.mxu0 0
    %810 = vmatpush1.bf16.msra.mxu0 0
    %811 = vmatprep.mubr.bf16.mxu0 0
    %812 = vmatmul.mubr.bf16.gmra.mrb[0].mxu0 %v707
    %v813 = vpop.f32.mrb[0].mxu0
    %v814 = vadd.f32 %v729, %v813
    %v815 = vpop.f32.mrb[0].mxu0
    %v816 = vpop.f32.mrb[0].mxu0
    %v817 = vpop.f32.mrb[0].mxu0
    %818 = vdwg.mxu0
    %v819 = vmax.f32 %v814, 0.0
    %v820 = vpack.c.bf16 %v819, %v819
    %v821 = vld [vmem:[%s5] sm:$0xf]
    %v822 = vld [vmem:[%s5 + $0x4] sm:$0xf]
    %v823 = vld [vmem:[%s5 + $0x8] sm:$0xf]
    %v824 = vld [vmem:[%s5 + $0xc] sm:$0xf]
    %v825 = vld [vmem:[%s5 + $0x10] sm:$0xf]
    %v826 = vld [vmem:[%s5 + $0x14] sm:$0xf]
    %v827 = vld [vmem:[%s5 + $0x18] sm:$0xf]
    %v828 = vld [vmem:[%s5 + $0x1c] sm:$0xf]
    %v829 = vld [vmem:[%s6] sm:$0x1]
    %v831 = vlaneseq
    %v832 = vshrl.u32 %v831, 7
    %v833 = vsub.s32 0, %v832
    %v834 = vrot.slane %v829, %v833
    %v844 = vunpack.c.l.b16 %v821
    %v845 = vunpack.c.l.b16 %v822
    %v846 = vunpack.c.l.b16 %v823
    %v847 = vunpack.c.l.b16 %v824
    %v848 = vunpack.c.l.b16 %v825
    %v849 = vunpack.c.l.b16 %v826
    %v850 = vunpack.c.l.b16 %v827
    %v851 = vunpack.c.l.b16 %v828
    %v852 = vpack.c.b16 %v845, %v844
    %v853 = vpack.c.b16 %v847, %v846
    %v854 = vpack.c.b16 %v849, %v848
    %v855 = vpack.c.b16 %v851, %v850
    %vm860 = vcmask 523264
    %v862 = vsel %vm860, %v820, 0
    %864 = vmatprep.subr.bf16.mxu0 0
    %865 = vmatpush1.bf16.msra.mxu0 %v852
    %866 = vmatprep.subr.bf16.mxu0 0
    %867 = vmatpush1.bf16.msra.mxu0 %v853
    %868 = vmatprep.subr.bf16.mxu0 0
    %869 = vmatpush1.bf16.msra.mxu0 %v854
    %870 = vmatprep.subr.bf16.mxu0 0
    %871 = vmatpush1.bf16.msra.mxu0 %v855
    %872 = vmatprep.subr.bf16.mxu0 0
    %873 = vmatpush1.bf16.msra.mxu0 0
    %874 = vmatprep.subr.bf16.mxu0 0
    %875 = vmatpush1.bf16.msra.mxu0 0
    %876 = vmatprep.subr.bf16.mxu0 0
    %877 = vmatpush1.bf16.msra.mxu0 0
    %878 = vmatprep.subr.bf16.mxu0 0
    %879 = vmatpush1.bf16.msra.mxu0 0
    %880 = vmatprep.subr.bf16.mxu0 0
    %881 = vmatpush1.bf16.msra.mxu0 0
    %882 = vmatprep.subr.bf16.mxu0 0
    %883 = vmatpush1.bf16.msra.mxu0 0
    %884 = vmatprep.subr.bf16.mxu0 0
    %885 = vmatpush1.bf16.msra.mxu0 0
    %886 = vmatprep.subr.bf16.mxu0 0
    %887 = vmatpush1.bf16.msra.mxu0 0
    %888 = vmatprep.subr.bf16.mxu0 0
    %889 = vmatpush1.bf16.msra.mxu0 0
    %890 = vmatprep.subr.bf16.mxu0 0
    %891 = vmatpush1.bf16.msra.mxu0 0
    %892 = vmatprep.subr.bf16.mxu0 0
    %893 = vmatpush1.bf16.msra.mxu0 0
    %894 = vmatprep.subr.bf16.mxu0 0
    %895 = vmatpush1.bf16.msra.mxu0 0
    %896 = vmatprep.mubr.bf16.mxu0 0
    %897 = vmatmul.mubr.bf16.gmra.mrb[0].mxu0 %v862
    %v898 = vpop.f32.mrb[0].mxu0
    %v899 = vadd.f32 %v834, %v898
    %v900 = vpop.f32.mrb[0].mxu0
    %v901 = vpop.f32.mrb[0].mxu0
    %v902 = vpop.f32.mrb[0].mxu0
    %903 = vdwg.mxu0
    %904 = vmax.xlane.f32.xlu0 %v899
    %v905 = vpop.xlane.xlu0 %904
    %v906 = vsub.f32 %v899, %v905
    %v907 = vmul.f32 %v906, 1.442695
    %v908 = vpow.pop %v907
    %909 = vadd.xlane.f32.xlu0 %v908
    %v910 = vpop.xlane.xlu0 %909
    %v911 = vlog2.pop %v910
    %v912 = vmul.f32 %v911, 0.6931472
    %v913 = vsub.f32 %v906, %v912
    %vm914 = vcmask 80896
    %915 = vst.msk [vmem:[#allocation5] sm:$0xff] %vm914, %v913
    // Predicated region
    $region34: #{neural_network_forward.1} parent=1 // pred_check
      _
    $region35: #{neural_network_forward.1} parent=1 // pred_check_branch
      %917 = sbr.rel (0) target = $region37
    $region36: #{neural_network_forward.1} parent=1 // pred_region
      %s919 = ssub.s32 128, 32
      %920 = vsyncadd [#allocation4], %s919
      %s921 = sshll.u32 [#allocation5], 4
      %s922 = int_to_ptr.vmem [resolvable:$true] %s921
      %927 = dma.vmem_to_hbm [thread:$0]  %s922, 32, %s7, [#allocation4], 32, 32, 2
    $region37: #{neural_network_forward.1} parent=1 // pred_fallthru
      _
    // Predicated region
    $region38: #{neural_network_forward.1} parent=1 // pred_check
      _
    $region39: #{neural_network_forward.1} parent=1 // pred_check_branch
      %929 = sbr.rel (0) target = $region41
    $region40: #{neural_network_forward.1} parent=1 // pred_region
      %930 = dma.done [#allocation4], 128
    $region41: #{neural_network_forward.1} parent=1 // pred_fallthru
      _
    %931 = vsyncpa [#allocation3], 1
    %932 = vsyncpa [#allocation4], 1

</llo_original>
